<compile_context>
chip_gen: v6e
topology: v6e:2x2x1
jax: 0.10.0
libtpu: 0.0.40
codegen_flags: <defaults>
</compile_context>

<pallas_src>
import functools

import jax
import jax.numpy as jnp
from jax import lax
from jax.experimental import pallas as pl
from jax.experimental.pallas import tpu as pltpu


# ---------------------------------------------------------------------------
# VMEM-budget helpers
# ---------------------------------------------------------------------------

def _vmem_capacity_bytes():
    try:
        info = pltpu.get_tpu_info()
        cap = getattr(info, "vmem_capacity_bytes", None)
        if cap:
            return int(cap)
    except Exception:
        pass
    return 128 * 1024 * 1024


def _vmem_budget_bytes():
    # Leave headroom below physical capacity for compiler scratch/regalloc:
    # v7x (64 MiB / TC) -> ~48 MiB, v5e/v6e (128 MiB) -> ~96 MiB.
    return (_vmem_capacity_bytes() * 3) // 4


def _sublane_multiple(dtype):
    bits = jnp.dtype(dtype).itemsize * 8
    if bits >= 32:
        return 8
    if bits == 16:
        return 16          # bf16/f16 pack two rows per sublane
    return 32               # int8 / fp8 pack four


def _tile_candidates(extent, mult):
    """Divisors of `extent` that are multiples of `mult`, plus the full extent
    (a full-extent block is always layout-legal)."""
    cands = {extent}
    d = mult
    while d < extent:
        if extent % d == 0:
            cands.add(d)
        d += mult
    return sorted(cands)


def _pick_tile(extent, mult, max_tile, fits):
    """Largest candidate tile <= max_tile that satisfies fits(); returns
    (tile, fits_budget)."""
    cands = _tile_candidates(extent, mult)
    ok = [c for c in cands if c <= max_tile and fits(c)]
    if ok:
        return max(ok), True
    return cands[0], bool(fits(cands[0]))


# ---------------------------------------------------------------------------
# Kernels
# ---------------------------------------------------------------------------

def _sdpa_kernel(*refs, inv_scale, has_bias, emit_attn):
    """Single-pass SDPA: full-Lk K/V resident, softmax over the whole row."""
    idx = 0
    q_ref = refs[idx]; idx += 1
    k_ref = refs[idx]; idx += 1
    v_ref = refs[idx]; idx += 1
    bias_ref = None
    if has_bias:
        bias_ref = refs[idx]; idx += 1
    out_ref = refs[idx]; idx += 1
    attn_ref = refs[idx] if emit_attn else None

    # Fold 1/scale into q: TQ*D multiplies instead of TQ*Lk on the score tile.
    qv = q_ref[...]
    qv = qv * jnp.asarray(inv_scale, qv.dtype)

    # Contract last dims of q and k directly (no K^T materialization); MXU
    # consumes the native input dtype and accumulates in f32.
    s = lax.dot_general(
        qv, k_ref[...],
        dimension_numbers=(((1,), (1,)), ((), ())),
        preferred_element_type=jnp.float32,
    )                                                       # (TQ, Lk) f32
    if bias_ref is not None:
        s = s + bias_ref[...].astype(jnp.float32)

    m = jnp.max(s, axis=-1, keepdims=True)
    e = jnp.exp(s - m)
    l = jnp.sum(e, axis=-1, keepdims=True)                  # (TQ, 1)
    p = e * pl.reciprocal(l, approx=True)                   # EUP vrcp slot

    # TODO(synk): nn.Dropout is identity in eval mode; training-mode dropout
    # (pltpu.prng_seed / prng_random_bits masking) is not implemented here.

    if attn_ref is not None:
        attn_ref[...] = p.astype(attn_ref.dtype)
    out_ref[...] = jnp.dot(
        p.astype(v_ref.dtype), v_ref[...], preferred_element_type=jnp.float32
    ).astype(out_ref.dtype)


def _sdpa_flash_kernel(*refs, inv_scale, has_bias):
    """Lk-tiled online-softmax SDPA (no attn output); grid axis 3 = K blocks."""
    idx = 0
    q_ref = refs[idx]; idx += 1
    k_ref = refs[idx]; idx += 1
    v_ref = refs[idx]; idx += 1
    bias_ref = None
    if has_bias:
        bias_ref = refs[idx]; idx += 1
    out_ref = refs[idx]; idx += 1
    m_ref, l_ref, acc_ref = refs[idx], refs[idx + 1], refs[idx + 2]

    ki = pl.program_id(3)

    @pl.when(ki == 0)
    def _():
        m_ref[...] = jnp.full_like(m_ref, -jnp.inf)
        l_ref[...] = jnp.zeros_like(l_ref)
        acc_ref[...] = jnp.zeros_like(acc_ref)

    qv = q_ref[...]
    qv = qv * jnp.asarray(inv_scale, qv.dtype)
    s = lax.dot_general(
        qv, k_ref[...],
        dimension_numbers=(((1,), (1,)), ((), ())),
        preferred_element_type=jnp.float32,
    )                                                       # (TQ, TK) f32
    if bias_ref is not None:
        s = s + bias_ref[...].astype(jnp.float32)

    m_prev = m_ref[...]
    m_new = jnp.maximum(m_prev, jnp.max(s, axis=-1, keepdims=True))
    alpha = jnp.exp(m_prev - m_new)
    p = jnp.exp(s - m_new)
    l_ref[...] = alpha * l_ref[...] + jnp.sum(p, axis=-1, keepdims=True)
    acc_ref[...] = alpha * acc_ref[...] + jnp.dot(
        p.astype(v_ref.dtype), v_ref[...], preferred_element_type=jnp.float32)
    m_ref[...] = m_new

    @pl.when(ki == pl.num_programs(3) - 1)
    def _():
        out_ref[...] = (
            acc_ref[...] * pl.reciprocal(l_ref[...], approx=True)
        ).astype(out_ref.dtype)


# ---------------------------------------------------------------------------
# Wrapper
# ---------------------------------------------------------------------------

def scaled_dot_product_attention(q, k, v, bias=None, *, scale, dropout=0.0,
                                 block_q=None, block_k=None,
                                 return_attn=True, attn_dtype=None):
    """Pallas TPU scaled dot-product attention.

    q: [B, H, Lq, D], k: [B, H, Lk, D], v: [B, H, Lk, Dv],
    bias: [H, Lq, Lk] or None (broadcast over batch).
    Returns (output [B, H, Lq, Dv], attn [B, H, Lq, Lk] or None).

    `dropout` is accepted for API parity; it is applied as identity (eval
    mode).  attn is emitted in `attn_dtype` (default: q.dtype); for bf16
    inputs this diverges slightly from an f32-softmax reference.
    """
    # TODO(synk): training-mode dropout is not implemented (identity only).
    del dropout

    B, H, Lq, D = q.shape
    Lk = k.shape[2]
    Dv = v.shape[3]
    inv_scale = 1.0 / float(scale)
    has_bias = bias is not None
    attn_dtype = q.dtype if attn_dtype is None else jnp.dtype(attn_dtype)

    in_sz = jnp.dtype(q.dtype).itemsize
    out_sz = jnp.dtype(q.dtype).itemsize
    attn_sz = jnp.dtype(attn_dtype).itemsize
    bias_sz = jnp.dtype(bias.dtype).itemsize if has_bias else 0
    mult = _sublane_multiple(q.dtype)
    budget = _vmem_budget_bytes()

    # Advisory cost estimate for XLA's scheduler.
    flops = 2 * B * H * Lq * Lk * (D + Dv)
    transcendentals = B * H * Lq * Lk
    bytes_accessed = (q.size * in_sz + k.size * in_sz + v.size * in_sz
                      + B * H * Lq * Dv * out_sz)
    if has_bias:
        bytes_accessed += B * H * Lq * Lk * bias_sz   # bias re-fetched per batch
    if return_attn:
        bytes_accessed += B * H * Lq * Lk * attn_sz
    cost = pl.CostEstimate(flops=flops, transcendentals=transcendentals,
                           bytes_accessed=bytes_accessed)

    # ---- single-pass VMEM footprint (per grid step, double-buffered) -------
    def single_pass_bytes(bq):
        f = 2 * bq * D * in_sz               # q block
        f += 2 * bq * Dv * out_sz            # out block
        if return_attn:
            f += 2 * bq * Lk * attn_sz       # attn block
        if has_bias:
            f += 2 * bq * Lk * bias_sz       # bias block
        f += 2 * Lk * D * in_sz              # K (resident across q blocks)
        f += 2 * Lk * Dv * in_sz             # V
        f += 3 * bq * Lk * 4                 # f32 score intermediates (s/e/p)
        return f

    if block_q is not None and Lq % block_q == 0:
        bq_single = block_q
        single_fits = single_pass_bytes(bq_single) <= budget
    else:
        bq_single, single_fits = _pick_tile(
            Lq, mult, 1024, lambda c: single_pass_bytes(c) <= budget)

    use_flash = (not return_attn) and (block_k is not None or not single_fits)

    compiler_params_single = pltpu.CompilerParams(
        dimension_semantics=("parallel", "parallel", "parallel"),
        vmem_limit_bytes=int(budget))
    compiler_params_flash = pltpu.CompilerParams(
        dimension_semantics=("parallel", "parallel", "parallel", "arbitrary"),
        vmem_limit_bytes=int(budget))

    if not use_flash:
        # ------------------------- single-pass path -------------------------
        bq = bq_single
        grid = (B, H, Lq // bq)

        q_spec = pl.BlockSpec((None, None, bq, D), lambda b, h, qi: (b, h, qi, 0))
        # K/V block indices independent of qi -> resident across the q axis.
        k_spec = pl.BlockSpec((None, None, Lk, D), lambda b, h, qi: (b, h, 0, 0))
        v_spec = pl.BlockSpec((None, None, Lk, Dv), lambda b, h, qi: (b, h, 0, 0))
        out_spec = pl.BlockSpec((None, None, bq, Dv), lambda b, h, qi: (b, h, qi, 0))

        in_specs = [q_spec, k_spec, v_spec]
        inputs = (q, k, v)
        if has_bias:
            in_specs.append(pl.BlockSpec((None, bq, Lk),
                                         lambda b, h, qi: (h, qi, 0)))
            inputs = inputs + (bias,)

        out_shape = [jax.ShapeDtypeStruct((B, H, Lq, Dv), q.dtype)]
        out_specs = [out_spec]
        if return_attn:
            out_shape.append(jax.ShapeDtypeStruct((B, H, Lq, Lk), attn_dtype))
            out_specs.append(pl.BlockSpec((None, None, bq, Lk),
                                          lambda b, h, qi: (b, h, qi, 0)))

        kernel = functools.partial(_sdpa_kernel, inv_scale=inv_scale,
                                   has_bias=has_bias, emit_attn=return_attn)

        results = pl.pallas_call(
            kernel,
            out_shape=tuple(out_shape),
            grid=grid,
            in_specs=in_specs,
            out_specs=tuple(out_specs),
            compiler_params=compiler_params_single,
            cost_estimate=cost,
        )(*inputs)

        if return_attn:
            return results[0], results[1]
        return results[0], None

    # ------------------------------ flash path ------------------------------
    if block_k is not None and Lk % block_k == 0:
        bk = block_k
    else:
        bk, _ = _pick_tile(Lk, 128, 512, lambda c: True)

    def flash_bytes(bq_c):
        f = 2 * bq_c * D * in_sz + 2 * bq_c * Dv * out_sz
        f += 2 * bk * D * in_sz + 2 * bk * Dv * in_sz
        if has_bias:
            f += 2 * bq_c * bk * bias_sz
        f += bq_c * Dv * 4 + 2 * bq_c * 128 * 4   # acc + m/l scratch (lane-padded)
        f += 3 * bq_c * bk * 4                    # f32 intermediates
        return f

    if block_q is not None and Lq % block_q == 0:
        bq = block_q
    else:
        bq, _ = _pick_tile(Lq, mult, 512, lambda c: flash_bytes(c) <= budget)

    grid = (B, H, Lq // bq, Lk // bk)

    q_spec = pl.BlockSpec((None, None, bq, D), lambda b, h, qi, ki: (b, h, qi, 0))
    k_spec = pl.BlockSpec((None, None, bk, D), lambda b, h, qi, ki: (b, h, ki, 0))
    v_spec = pl.BlockSpec((None, None, bk, Dv), lambda b, h, qi, ki: (b, h, ki, 0))
    out_spec = pl.BlockSpec((None, None, bq, Dv), lambda b, h, qi, ki: (b, h, qi, 0))

    in_specs = [q_spec, k_spec, v_spec]
    inputs = (q, k, v)
    if has_bias:
        in_specs.append(pl.BlockSpec((None, bq, bk),
                                     lambda b, h, qi, ki: (h, qi, ki)))
        inputs = inputs + (bias,)

    kernel = functools.partial(_sdpa_flash_kernel, inv_scale=inv_scale,
                               has_bias=has_bias)

    out = pl.pallas_call(
        kernel,
        out_shape=jax.ShapeDtypeStruct((B, H, Lq, Dv), q.dtype),
        grid=grid,
        in_specs=in_specs,
        out_specs=out_spec,
        scratch_shapes=[pltpu.VMEM((bq, 1), jnp.float32),    # running max
                        pltpu.VMEM((bq, 1), jnp.float32),    # running sum
                        pltpu.VMEM((bq, Dv), jnp.float32)],  # output accumulator
        compiler_params=compiler_params_flash,
        cost_estimate=cost,
    )(*inputs)
    return out, None


# ---------------------------------------------------------------------------
# Reference + self-test
# ---------------------------------------------------------------------------

def _reference(q, k, v, bias, scale):
    s = jnp.einsum("bhqd,bhkd->bhqk", q.astype(jnp.float32) / scale,
                   k.astype(jnp.float32))
    if bias is not None:
        s = s + bias[None, ...].astype(jnp.float32)
    p = jax.nn.softmax(s, axis=-1)
    o = jnp.einsum("bhqk,bhkd->bhqd", p, v.astype(jnp.float32))
    return o, p


if __name__ == "__main__":
    key = jax.random.PRNGKey(0)
    kq, kk, kv, kb = jax.random.split(key, 4)

    # Tolerance accounts for the approx (EUP) reciprocal in the softmax denom.
    TOL = dict(atol=2e-3, rtol=2e-3)

    # --- small shapes, bias path (dropout=0 -> eval-mode identity) ----------
    B, H, Lq, Lk, D = 2, 2, 8, 8, 32
    scale = float(D) ** 0.5
    q = jax.random.normal(kq, (B, H, Lq, D), dtype=jnp.float32)
    k = jax.random.normal(kk, (B, H, Lk, D), dtype=jnp.float32)
    v = jax.random.normal(kv, (B, H, Lk, D), dtype=jnp.float32)
    bias = 0.1 * jax.random.normal(kb, (H, Lq, Lk), dtype=jnp.float32)

    out, attn = scaled_dot_product_attention(q, k, v, bias, scale=scale,
                                             dropout=0.0)
    out = jax.block_until_ready(out)
    attn = jax.block_until_ready(attn)
    ref_out, ref_attn = _reference(q, k, v, bias, scale)
    assert jnp.allclose(out, ref_out, **TOL)
    assert jnp.allclose(attn, ref_attn, **TOL)

    # --- no-bias path --------------------------------------------------------
    out_nb, attn_nb = scaled_dot_product_attention(q, k, v, None, scale=scale)
    out_nb = jax.block_until_ready(out_nb)
    ref_out_nb, ref_attn_nb = _reference(q, k, v, None, scale)
    assert jnp.allclose(out_nb, ref_out_nb, **TOL)
    assert jnp.allclose(attn_nb, ref_attn_nb, **TOL)

    # --- attn-skipping path (avoids the dominant HBM writeback) -------------
    out_only, none_attn = scaled_dot_product_attention(
        q, k, v, bias, scale=scale, return_attn=False)
    out_only = jax.block_until_ready(out_only)
    assert none_attn is None
    assert jnp.allclose(out_only, ref_out, **TOL)

    # --- flash (Lk-tiled online-softmax) path, forced via block_k ------------
    B2, H2, L2, D2 = 1, 2, 256, 64
    scale2 = float(D2) ** 0.5
    kq2, kk2, kv2, kb2 = jax.random.split(jax.random.PRNGKey(1), 4)
    q2 = jax.random.normal(kq2, (B2, H2, L2, D2), dtype=jnp.float32)
    k2 = jax.random.normal(kk2, (B2, H2, L2, D2), dtype=jnp.float32)
    v2 = jax.random.normal(kv2, (B2, H2, L2, D2), dtype=jnp.float32)
    bias2 = 0.1 * jax.random.normal(kb2, (H2, L2, L2), dtype=jnp.float32)

    out_f, _ = scaled_dot_product_attention(q2, k2, v2, bias2, scale=scale2,
                                            return_attn=False, block_k=128)
    out_f = jax.block_until_ready(out_f)
    ref_out2, _ = _reference(q2, k2, v2, bias2, scale2)
    assert jnp.allclose(out_f, ref_out2, **TOL)

    print("KERNEL_OK")
</pallas_src>

<mosaic_0001>
module attributes {stable_mosaic.version = 11 : i64} {
  func.func @_sdpa_kernel(%arg0: i32, %arg1: i32, %arg2: i32, %arg3: memref<1x1x8x32xf32, #tpu.memory_space<vmem>>, %arg4: memref<1x1x8x32xf32, #tpu.memory_space<vmem>>, %arg5: memref<1x1x8x32xf32, #tpu.memory_space<vmem>>, %arg6: memref<1x8x8xf32, #tpu.memory_space<vmem>>, %arg7: memref<1x1x8x32xf32, #tpu.memory_space<vmem>>, %arg8: memref<1x1x8x8xf32, #tpu.memory_space<vmem>>) attributes {dimension_semantics = [#tpu.dimension_semantics<parallel>, #tpu.dimension_semantics<parallel>, #tpu.dimension_semantics<parallel>], iteration_bounds = array<i64: 2, 2, 1>, scalar_prefetch = 0 : i64, scratch_operands = 0 : i64, tpu.core_type = #tpu.core_type<tc>, window_params = [{transform_indices = @transform_0, window_bounds = array<i64: 1, 1, 8, 32>}, {transform_indices = @transform_1, window_bounds = array<i64: 1, 1, 8, 32>}, {transform_indices = @transform_2, window_bounds = array<i64: 1, 1, 8, 32>}, {transform_indices = @transform_3, window_bounds = array<i64: 1, 8, 8>}, {transform_indices = @transform_4, window_bounds = array<i64: 1, 1, 8, 32>}, {transform_indices = @transform_5, window_bounds = array<i64: 1, 1, 8, 8>}]} {
    %c0 = arith.constant 0 : index
    %c0_0 = arith.constant 0 : index
    %c0_1 = arith.constant 0 : index
    %c0_2 = arith.constant 0 : index
    %0 = vector.load %arg3[%c0, %c0_0, %c0_1, %c0_2] : memref<1x1x8x32xf32, #tpu.memory_space<vmem>>, vector<1x1x8x32xf32>
    %1 = vector.shape_cast %0 : vector<1x1x8x32xf32> to vector<8x32xf32>
    %cst = arith.constant 0.176776692 : f32
    %2 = vector.broadcast %cst : f32 to vector<8x32xf32>
    %3 = arith.mulf %1, %2 : vector<8x32xf32>
    %c0_3 = arith.constant 0 : index
    %c0_4 = arith.constant 0 : index
    %c0_5 = arith.constant 0 : index
    %c0_6 = arith.constant 0 : index
    %4 = vector.load %arg4[%c0_3, %c0_4, %c0_5, %c0_6] : memref<1x1x8x32xf32, #tpu.memory_space<vmem>>, vector<1x1x8x32xf32>
    %5 = vector.shape_cast %4 : vector<1x1x8x32xf32> to vector<8x32xf32>
    %cst_7 = arith.constant dense<0.000000e+00> : vector<8x8xf32>
    %6 = tpu.matmul %3, %5, %cst_7 {dimension_numbers = #tpu.dot_dimension_numbers<[1], [1], [0], [0], [0, 0, 1, 0], [], []>} : vector<8x32xf32>, vector<8x32xf32>, vector<8x8xf32> -> vector<8x8xf32>
    %c0_8 = arith.constant 0 : index
    %c0_9 = arith.constant 0 : index
    %c0_10 = arith.constant 0 : index
    %7 = vector.load %arg6[%c0_8, %c0_9, %c0_10] : memref<1x8x8xf32, #tpu.memory_space<vmem>>, vector<1x8x8xf32>
    %8 = vector.shape_cast %7 : vector<1x8x8xf32> to vector<8x8xf32>
    %9 = arith.addf %6, %8 : vector<8x8xf32>
    %cst_11 = arith.constant dense<0xFF800000> : vector<8xf32>
    %10 = vector.multi_reduction <maximumf>, %9, %cst_11 [1] : vector<8x8xf32> to vector<8xf32>
    %11 = vector.shape_cast %10 : vector<8xf32> to vector<8x1xf32>
    %12 = vector.broadcast %11 : vector<8x1xf32> to vector<8x8xf32>
    %13 = arith.subf %9, %12 : vector<8x8xf32>
    %14 = math.exp %13 : vector<8x8xf32>
    %cst_12 = arith.constant dense<0.000000e+00> : vector<8xf32>
    %15 = vector.multi_reduction <add>, %14, %cst_12 [1] : vector<8x8xf32> to vector<8xf32>
    %16 = vector.shape_cast %15 : vector<8xf32> to vector<8x1xf32>
    %17 = tpu.reciprocal %16 {approx = true} : vector<8x1xf32> -> vector<8x1xf32>
    %18 = vector.broadcast %17 : vector<8x1xf32> to vector<8x8xf32>
    %19 = arith.mulf %14, %18 : vector<8x8xf32>
    %c0_13 = arith.constant 0 : index
    %c0_14 = arith.constant 0 : index
    %c0_15 = arith.constant 0 : index
    %c0_16 = arith.constant 0 : index
    %20 = vector.load %arg8[%c0_13, %c0_14, %c0_15, %c0_16] : memref<1x1x8x8xf32, #tpu.memory_space<vmem>>, vector<1x1x8x8xf32>
    %21 = vector.shape_cast %20 : vector<1x1x8x8xf32> to vector<8x8xf32>
    %22 = vector.shape_cast %19 : vector<8x8xf32> to vector<1x1x8x8xf32>
    tpu.vector_store %arg8[%c0_13, %c0_14, %c0_15, %c0_16], %22 {strides = array<i32>} : memref<1x1x8x8xf32, #tpu.memory_space<vmem>>, vector<1x1x8x8xf32>,
    %c0_17 = arith.constant 0 : index
    %c0_18 = arith.constant 0 : index
    %c0_19 = arith.constant 0 : index
    %c0_20 = arith.constant 0 : index
    %23 = vector.load %arg5[%c0_17, %c0_18, %c0_19, %c0_20] : memref<1x1x8x32xf32, #tpu.memory_space<vmem>>, vector<1x1x8x32xf32>
    %24 = vector.shape_cast %23 : vector<1x1x8x32xf32> to vector<8x32xf32>
    %cst_21 = arith.constant dense<0.000000e+00> : vector<8x32xf32>
    %25 = tpu.matmul %19, %24, %cst_21 {dimension_numbers = #tpu.dot_dimension_numbers<[1], [0], [0], [1], [0, 0, 1, 1], [], []>} : vector<8x8xf32>, vector<8x32xf32>, vector<8x32xf32> -> vector<8x32xf32>
    %c0_22 = arith.constant 0 : index
    %c0_23 = arith.constant 0 : index
    %c0_24 = arith.constant 0 : index
    %c0_25 = arith.constant 0 : index
    %26 = vector.load %arg7[%c0_22, %c0_23, %c0_24, %c0_25] : memref<1x1x8x32xf32, #tpu.memory_space<vmem>>, vector<1x1x8x32xf32>
    %27 = vector.shape_cast %26 : vector<1x1x8x32xf32> to vector<8x32xf32>
    %28 = vector.shape_cast %25 : vector<8x32xf32> to vector<1x1x8x32xf32>
    tpu.vector_store %arg7[%c0_22, %c0_23, %c0_24, %c0_25], %28 {strides = array<i32>} : memref<1x1x8x32xf32, #tpu.memory_space<vmem>>, vector<1x1x8x32xf32>,
    return
  }
  func.func @transform_0(%arg0: i32, %arg1: i32, %arg2: i32) -> (i32, i32, i32, i32) {
    %c0_i32 = arith.constant 0 : i32
    %c0_i32_0 = arith.constant 0 : i32
    return %arg0, %arg1, %arg2, %c0_i32 : i32, i32, i32, i32
  }
  func.func @transform_1(%arg0: i32, %arg1: i32, %arg2: i32) -> (i32, i32, i32, i32) {
    %c0_i32 = arith.constant 0 : i32
    %c0_i32_0 = arith.constant 0 : i32
    %c0_i32_1 = arith.constant 0 : i32
    return %arg0, %arg1, %c0_i32, %c0_i32_0 : i32, i32, i32, i32
  }
  func.func @transform_2(%arg0: i32, %arg1: i32, %arg2: i32) -> (i32, i32, i32, i32) {
    %c0_i32 = arith.constant 0 : i32
    %c0_i32_0 = arith.constant 0 : i32
    %c0_i32_1 = arith.constant 0 : i32
    return %arg0, %arg1, %c0_i32, %c0_i32_0 : i32, i32, i32, i32
  }
  func.func @transform_3(%arg0: i32, %arg1: i32, %arg2: i32) -> (i32, i32, i32) {
    %c0_i32 = arith.constant 0 : i32
    %c0_i32_0 = arith.constant 0 : i32
    return %arg1, %arg2, %c0_i32 : i32, i32, i32
  }
  func.func @transform_4(%arg0: i32, %arg1: i32, %arg2: i32) -> (i32, i32, i32, i32) {
    %c0_i32 = arith.constant 0 : i32
    %c0_i32_0 = arith.constant 0 : i32
    return %arg0, %arg1, %arg2, %c0_i32 : i32, i32, i32, i32
  }
  func.func @transform_5(%arg0: i32, %arg1: i32, %arg2: i32) -> (i32, i32, i32, i32) {
    %c0_i32 = arith.constant 0 : i32
    %c0_i32_0 = arith.constant 0 : i32
    return %arg0, %arg1, %arg2, %c0_i32 : i32, i32, i32, i32
  }
}

</mosaic_0001>

<llo_original>
// kernel: tpu_custom_call.1
$region0: #{tpu_custom_call.1}
  #allocation0 [shape = 'u32[]', space=smem, size = 0x4, offset = 0x4, fixed_abs, tag = 'smem constant byte address 0x4 - core index']
  #allocation1 [shape = 'u32[144,128]{1,0:T(1,128)}', space=vmem, size = 0x12000, scoped, tag = 'internal scratch']
  %s0 = inlined_call_operand.hbm [shape: f32[2,2,8,32], index: 0, kind: input, shape index: {}]
  %s1 = inlined_call_operand.hbm [shape: f32[2,2,8,32], index: 1, kind: input, shape index: {}]
  %s2 = inlined_call_operand.hbm [shape: f32[2,2,8,32], index: 2, kind: input, shape index: {}]
  %s3 = inlined_call_operand.hbm [shape: f32[2,8,8], index: 3, kind: input, shape index: {}]
  %s4 = inlined_call_operand.hbm [shape: f32[2,2,8,32], index: 4, kind: output, shape index: {0}]
  %s5 = inlined_call_operand.hbm [shape: f32[2,2,8,8], index: 5, kind: output, shape index: {1}]
  %6 = xla_tuple %s4, %s5
  %s7 = sld [smem:[#allocation0]]
  $region73: #{tpu_custom_call.1} parent=0
    _
  %s9 = ssub.s32 1, %s7
  %s10 = scalar_select 0, %s9, %s7
  $region1: #{tpu_custom_call.1} parent=0
    #allocation2 [shape = 'u8[8192]{0}', space=vmem, size = 0x2000, scoped, tag = 'input window, operand 0']
    #allocation3 [shape = 's32[2]{0}', space=sflag, size = 0x8, scoped, tag = 'scoped memory for tpu_custom_call.1']
    #allocation4 [shape = 's32[2]{0}', space=sflag, size = 0x8, scoped, tag = 'scoped memory for tpu_custom_call.1']
    #allocation5 [shape = 'u8[8192]{0}', space=vmem, size = 0x2000, scoped, tag = 'input window, operand 1']
    #allocation6 [shape = 's32[2]{0}', space=sflag, size = 0x8, scoped, tag = 'scoped memory for tpu_custom_call.1']
    #allocation7 [shape = 'u8[8192]{0}', space=vmem, size = 0x2000, scoped, tag = 'input window, operand 2']
    #allocation8 [shape = 'u8[8192]{0}', space=vmem, size = 0x2000, scoped, tag = 'input window, operand 3']
    #allocation9 [shape = 's32[2]{0}', space=sflag, size = 0x8, scoped, tag = 'scoped memory for tpu_custom_call.1']
    #allocation10 [shape = 'u8[8192]{0}', space=vmem, size = 0x2000, scoped, tag = 'output window, operand 0']
    #allocation11 [shape = 'u8[8192]{0}', space=vmem, size = 0x2000, scoped, tag = 'output window, operand 1']
    #allocation12 [shape = 's32[2]{0}', space=sflag, size = 0x8, scoped, tag = 'scoped memory for tpu_custom_call.1']
    %11 = vsyncpa [#allocation3], 0
    %s12 = scalar_lea.sflag [#allocation3], 1
    %13 = vsyncpa %s12, 0
    %14 = vsyncpa [#allocation6], 0
    %s15 = scalar_lea.sflag [#allocation6], 1
    %16 = vsyncpa %s15, 0
    %17 = vsyncpa [#allocation9], 0
    %s18 = scalar_lea.sflag [#allocation9], 1
    %19 = vsyncpa %s18, 0
    %20 = vsyncpa [#allocation4], 0
    %s21 = scalar_lea.sflag [#allocation4], 1
    %22 = vsyncpa %s21, 0
    %23 = vsyncpa [#allocation12], 0
    %s24 = scalar_lea.sflag [#allocation12], 1
    %25 = vsyncpa %s24, 0
    loop: start=0, step=1, limit=6
    $region2: #{tpu_custom_call.1} parent=1 // loop_pre_header
      _
    $region3: #{tpu_custom_call.1} parent=1 // loop_header
      %s27 = sphi 0, %s31
      %p28 = scmp.ge.s32.totalorder %s27, 6
      %s34 = sphi 0, %s53
      %s35 = sphi 0, %s49
      %s36 = sphi 0, %s45
      %s37 = sphi 0, %s34
      %s38 = sphi 0, %s35
      %s39 = sphi 0, %s36
      %s40 = sphi 0, %s37
      %s41 = sphi 0, %s38
      %s42 = sphi 0, %s39
      %s60 = sphi 0, %s62
      %s63 = sphi 0, %s60
      %s64 = sphi 0, %s63
      %s80 = sphi 0, %s64
      %s88 = sphi 0, %s90
      %s91 = sphi 0, %s88
      %s92 = sphi 0, %s91
      %s108 = sphi 0, %s92
      %s116 = sphi 0, %s118
      %s119 = sphi 0, %s116
      %s120 = sphi 0, %s119
      %s136 = sphi 0, %s120
      %s144 = sphi 0, %s146
      %s147 = sphi 0, %s144
      %s148 = sphi 0, %s147
      %s164 = sphi 0, %s148
      %s174 = sphi 0, %s176
      %s177 = sphi 0, %s174
      %s178 = sphi 0, %s177
      %s194 = sphi 0, %s178
      %s204 = sphi 0, %s206
      %s207 = sphi 0, %s204
      %s208 = sphi 0, %s207
      %s224 = sphi 0, %s208
    $region4: #{tpu_custom_call.1} parent=1 // loop_header_branch
      %30 = sbr.rel (%p28) target = $region8
    $region5: #{tpu_custom_call.1} parent=1 // loop_body
      %s32 = ssub.s32 %s27, 1
      %s33 = ssub.s32 %s27, 2
      %s43 = sadd.s32 1, %s36
      %p44 = scmp.ge.s32.totalorder %s43, 1
      %s45 = scalar_select %p44, 0, %s43
      %s46 = sadd.s32 1, %s35
      %s47 = scalar_select %p44, %s46, %s35
      %p48 = scmp.ge.s32.totalorder %s47, 2
      %s49 = scalar_select %p48, 0, %s47
      %s50 = sadd.s32 1, %s34
      %s51 = scalar_select %p48, %s50, %s34
      %p52 = scmp.ge.s32.totalorder %s51, 2
      %s53 = scalar_select %p52, 0, %s51
      %s54 = ssub.s32 %s34, %s53
      %s55 = ssub.s32 %s35, %s49
      %s56 = sor.u32 %s54, %s55
      %s57 = ssub.s32 %s36, %s45
      %s58 = sor.u32 %s56, %s57
      %p59 = scmp.eq.s32.totalorder %s58, 0
      %s61 = sadd.s32 %s60, 1
      %s62 = scalar_select %p59, %s60, %s61
      %p65 = pneg %p59
      %p66 = scmp.eq.s32.totalorder %s27, 3
      %p67 = por %p65, %p66
      %p68 = scmp.ne.s32.totalorder %s60, %s63
      %p69 = scmp.eq.s32.totalorder %s27, 0
      %p70 = por %p68, %p69
      %p71 = scmp.ne.s32.totalorder %s60, %s63
      %p72 = scmp.eq.s32.totalorder %s32, 3
      %p73 = por %p71, %p72
      %p74 = scmp.ne.s32.totalorder %s63, %s64
      %p75 = scmp.eq.s32.totalorder %s32, 0
      %p76 = por %p74, %p75
      %p77 = scmp.ne.s32.totalorder %s63, %s64
      %p78 = scmp.eq.s32.totalorder %s33, 3
      %p79 = por %p77, %p78
      %p81 = scmp.ne.s32.totalorder %s64, %s80
      %p82 = scmp.eq.s32.totalorder %s33, 0
      %p83 = por %p81, %p82
      %s84 = ssub.s32 %s34, %s53
      %s85 = ssub.s32 %s35, %s49
      %s86 = sor.u32 %s84, %s85
      %p87 = scmp.eq.s32.totalorder %s86, 0
      %s89 = sadd.s32 %s88, 1
      %s90 = scalar_select %p87, %s88, %s89
      %p93 = pneg %p87
      %p94 = scmp.eq.s32.totalorder %s27, 3
      %p95 = por %p93, %p94
      %p96 = scmp.ne.s32.totalorder %s88, %s91
      %p97 = scmp.eq.s32.totalorder %s27, 0
      %p98 = por %p96, %p97
      %p99 = scmp.ne.s32.totalorder %s88, %s91
      %p100 = scmp.eq.s32.totalorder %s32, 3
      %p101 = por %p99, %p100
      %p102 = scmp.ne.s32.totalorder %s91, %s92
      %p103 = scmp.eq.s32.totalorder %s32, 0
      %p104 = por %p102, %p103
      %p105 = scmp.ne.s32.totalorder %s91, %s92
      %p106 = scmp.eq.s32.totalorder %s33, 3
      %p107 = por %p105, %p106
      %p109 = scmp.ne.s32.totalorder %s92, %s108
      %p110 = scmp.eq.s32.totalorder %s33, 0
      %p111 = por %p109, %p110
      %s112 = ssub.s32 %s34, %s53
      %s113 = ssub.s32 %s35, %s49
      %s114 = sor.u32 %s112, %s113
      %p115 = scmp.eq.s32.totalorder %s114, 0
      %s117 = sadd.s32 %s116, 1
      %s118 = scalar_select %p115, %s116, %s117
      %p121 = pneg %p115
      %p122 = scmp.eq.s32.totalorder %s27, 3
      %p123 = por %p121, %p122
      %p124 = scmp.ne.s32.totalorder %s116, %s119
      %p125 = scmp.eq.s32.totalorder %s27, 0
      %p126 = por %p124, %p125
      %p127 = scmp.ne.s32.totalorder %s116, %s119
      %p128 = scmp.eq.s32.totalorder %s32, 3
      %p129 = por %p127, %p128
      %p130 = scmp.ne.s32.totalorder %s119, %s120
      %p131 = scmp.eq.s32.totalorder %s32, 0
      %p132 = por %p130, %p131
      %p133 = scmp.ne.s32.totalorder %s119, %s120
      %p134 = scmp.eq.s32.totalorder %s33, 3
      %p135 = por %p133, %p134
      %p137 = scmp.ne.s32.totalorder %s120, %s136
      %p138 = scmp.eq.s32.totalorder %s33, 0
      %p139 = por %p137, %p138
      %s140 = ssub.s32 %s35, %s49
      %s141 = ssub.s32 %s36, %s45
      %s142 = sor.u32 %s140, %s141
      %p143 = scmp.eq.s32.totalorder %s142, 0
      %s145 = sadd.s32 %s144, 1
      %s146 = scalar_select %p143, %s144, %s145
      %p149 = pneg %p143
      %p150 = scmp.eq.s32.totalorder %s27, 3
      %p151 = por %p149, %p150
      %p152 = scmp.ne.s32.totalorder %s144, %s147
      %p153 = scmp.eq.s32.totalorder %s27, 0
      %p154 = por %p152, %p153
      %p155 = scmp.ne.s32.totalorder %s144, %s147
      %p156 = scmp.eq.s32.totalorder %s32, 3
      %p157 = por %p155, %p156
      %p158 = scmp.ne.s32.totalorder %s147, %s148
      %p159 = scmp.eq.s32.totalorder %s32, 0
      %p160 = por %p158, %p159
      %p161 = scmp.ne.s32.totalorder %s147, %s148
      %p162 = scmp.eq.s32.totalorder %s33, 3
      %p163 = por %p161, %p162
      %p165 = scmp.ne.s32.totalorder %s148, %s164
      %p166 = scmp.eq.s32.totalorder %s33, 0
      %p167 = por %p165, %p166
      %s168 = ssub.s32 %s34, %s53
      %s169 = ssub.s32 %s35, %s49
      %s170 = sor.u32 %s168, %s169
      %s171 = ssub.s32 %s36, %s45
      %s172 = sor.u32 %s170, %s171
      %p173 = scmp.eq.s32.totalorder %s172, 0
      %s175 = sadd.s32 %s174, 1
      %s176 = scalar_select %p173, %s174, %s175
      %p179 = pneg %p173
      %p180 = scmp.eq.s32.totalorder %s27, 3
      %p181 = por %p179, %p180
      %p182 = scmp.ne.s32.totalorder %s174, %s177
      %p183 = scmp.eq.s32.totalorder %s27, 0
      %p184 = por %p182, %p183
      %p185 = scmp.ne.s32.totalorder %s174, %s177
      %p186 = scmp.eq.s32.totalorder %s32, 3
      %p187 = por %p185, %p186
      %p188 = scmp.ne.s32.totalorder %s177, %s178
      %p189 = scmp.eq.s32.totalorder %s32, 0
      %p190 = por %p188, %p189
      %p191 = scmp.ne.s32.totalorder %s177, %s178
      %p192 = scmp.eq.s32.totalorder %s33, 3
      %p193 = por %p191, %p192
      %p195 = scmp.ne.s32.totalorder %s178, %s194
      %p196 = scmp.eq.s32.totalorder %s33, 0
      %p197 = por %p195, %p196
      %s198 = ssub.s32 %s34, %s53
      %s199 = ssub.s32 %s35, %s49
      %s200 = sor.u32 %s198, %s199
      %s201 = ssub.s32 %s36, %s45
      %s202 = sor.u32 %s200, %s201
      %p203 = scmp.eq.s32.totalorder %s202, 0
      %s205 = sadd.s32 %s204, 1
      %s206 = scalar_select %p203, %s204, %s205
      %p209 = pneg %p203
      %p210 = scmp.eq.s32.totalorder %s27, 3
      %p211 = por %p209, %p210
      %p212 = scmp.ne.s32.totalorder %s204, %s207
      %p213 = scmp.eq.s32.totalorder %s27, 0
      %p214 = por %p212, %p213
      %p215 = scmp.ne.s32.totalorder %s204, %s207
      %p216 = scmp.eq.s32.totalorder %s32, 3
      %p217 = por %p215, %p216
      %p218 = scmp.ne.s32.totalorder %s207, %s208
      %p219 = scmp.eq.s32.totalorder %s32, 0
      %p220 = por %p218, %p219
      %p221 = scmp.ne.s32.totalorder %s207, %s208
      %p222 = scmp.eq.s32.totalorder %s33, 3
      %p223 = por %p221, %p222
      %p225 = scmp.ne.s32.totalorder %s208, %s224
      %p226 = scmp.eq.s32.totalorder %s33, 0
      %p227 = por %p225, %p226
      %p228 = scmp.le.s32.totalorder 1, %s27
      %p229 = scmp.lt.s32.totalorder %s27, 5
      %p230 = pnand %p228, %p229
      %p231 = pneg %p230
      // Predicated region
      $region9: #{tpu_custom_call.1} parent=5 // pred_check
        _
      $region10: #{tpu_custom_call.1} parent=5 // pred_check_branch
        %233 = sbr.rel (%p230) target = $region12
      $region11: #{tpu_custom_call.1} parent=5 // pred_region
        %s234 = ssub.s32 %s27, 1
      $region12: #{tpu_custom_call.1} parent=5 // pred_fallthru
        _
      %p235 = scmp.lt.s32.totalorder %s27, 4
      // Predicated region
      $region13: #{tpu_custom_call.1} parent=5 // pred_check
        %p236 = pneg %p235
      $region14: #{tpu_custom_call.1} parent=5 // pred_check_branch
        %238 = sbr.rel (%p236) target = $region16
      $region15: #{tpu_custom_call.1} parent=5 // pred_region
        // Predicated region
        $region17: #{tpu_custom_call.1} parent=15 // pred_check
          %p239 = pneg %p70
        $region18: #{tpu_custom_call.1} parent=15 // pred_check_branch
          %241 = sbr.rel (%p239) target = $region20
        $region19: #{tpu_custom_call.1} parent=15 // pred_region
          %s242 = sand.u32 %s60, 1
          %s243 = scalar_lea.sflag [#allocation3], %s242
          %s244 = sand.u32 %s60, 1
          %s245 = smul.addr %s244, 8
          %s246 = scalar_lea.vmem [#allocation2], %s245
          %s248 = ssub.s32 128, 128
          %249 = vsyncadd %s243, %s248
          %s250 = sadd.s32 %s36, %s35
          %s251 = smul.addr %s34, 2
          %s252 = sadd.s32 %s250, %s251
          %s253 = smul.addr %s252, 128
          %s254 = scalar_lea.hbm %s0, %s253
          %s256 = sshll.u32 %s246, 4
          %s257 = int_to_ptr.vmem [resolvable:$true] %s256
          %259 = dma.hbm_to_vmem [thread:$0]  %s254, 128, %s257, %s243
        $region20: #{tpu_custom_call.1} parent=15 // pred_fallthru
          _
        // Predicated region
        $region21: #{tpu_custom_call.1} parent=15 // pred_check
          %p260 = pneg %p98
        $region22: #{tpu_custom_call.1} parent=15 // pred_check_branch
          %262 = sbr.rel (%p260) target = $region24
        $region23: #{tpu_custom_call.1} parent=15 // pred_region
          %s263 = sand.u32 %s27, 1
          %s264 = scalar_lea.sflag [#allocation6], %s263
          %s265 = sand.u32 %s88, 1
          %s266 = smul.addr %s265, 8
          %s267 = scalar_lea.vmem [#allocation5], %s266
          %s269 = ssub.s32 128, 128
          %270 = vsyncadd %s264, %s269
          %s271 = smul.addr %s34, 2
          %s272 = sadd.s32 %s35, %s271
          %s273 = smul.addr %s272, 128
          %s274 = scalar_lea.hbm %s1, %s273
          %s276 = sshll.u32 %s267, 4
          %s277 = int_to_ptr.vmem [resolvable:$true] %s276
          %279 = dma.hbm_to_vmem [thread:$0]  %s274, 128, %s277, %s264
        $region24: #{tpu_custom_call.1} parent=15 // pred_fallthru
          _
        // Predicated region
        $region25: #{tpu_custom_call.1} parent=15 // pred_check
          %p280 = pneg %p126
        $region26: #{tpu_custom_call.1} parent=15 // pred_check_branch
          %282 = sbr.rel (%p280) target = $region28
        $region27: #{tpu_custom_call.1} parent=15 // pred_region
          %s283 = sand.u32 %s27, 1
          %s284 = scalar_lea.sflag [#allocation6], %s283
          %s285 = sand.u32 %s116, 1
          %s286 = smul.addr %s285, 8
          %s287 = scalar_lea.vmem [#allocation7], %s286
          %s289 = ssub.s32 128, 128
          %290 = vsyncadd %s284, %s289
          %s291 = smul.addr %s34, 2
          %s292 = sadd.s32 %s35, %s291
          %s293 = smul.addr %s292, 128
          %s294 = scalar_lea.hbm %s2, %s293
          %s296 = sshll.u32 %s287, 4
          %s297 = int_to_ptr.vmem [resolvable:$true] %s296
          %299 = dma.hbm_to_vmem [thread:$0]  %s294, 128, %s297, %s284
        $region28: #{tpu_custom_call.1} parent=15 // pred_fallthru
          _
        // Predicated region
        $region29: #{tpu_custom_call.1} parent=15 // pred_check
          %p300 = pneg %p154
        $region30: #{tpu_custom_call.1} parent=15 // pred_check_branch
          %302 = sbr.rel (%p300) target = $region32
        $region31: #{tpu_custom_call.1} parent=15 // pred_region
          %s303 = sand.u32 %s144, 1
          %s304 = scalar_lea.sflag [#allocation9], %s303
          %s305 = sand.u32 %s144, 1
          %s306 = smul.addr %s305, 8
          %s307 = scalar_lea.vmem [#allocation8], %s306
          %s309 = ssub.s32 128, 128
          %310 = vsyncadd %s304, %s309
          %s311 = sadd.s32 %s36, %s35
          %s312 = smul.addr %s311, 128
          %s313 = scalar_lea.hbm %s3, %s312
          %s315 = sshll.u32 %s307, 4
          %s316 = int_to_ptr.vmem [resolvable:$true] %s315
          %318 = dma.hbm_to_vmem [thread:$0]  %s313, 128, %s316, %s304
        $region32: #{tpu_custom_call.1} parent=15 // pred_fallthru
          _
      $region16: #{tpu_custom_call.1} parent=5 // pred_fallthru
        _
      %p319 = scmp.le.s32.totalorder 1, %s27
      %p320 = scmp.lt.s32.totalorder %s27, 5
      %p321 = pnand %p319, %p320
      %p322 = pneg %p321
      // Predicated region
      $region33: #{tpu_custom_call.1} parent=5 // pred_check
        _
      $region34: #{tpu_custom_call.1} parent=5 // pred_check_branch
        %324 = sbr.rel (%p321) target = $region36
      $region35: #{tpu_custom_call.1} parent=5 // pred_region
        %s325 = ssub.s32 %s27, 1
        %s326 = sand.u32 %s63, 1
        %s327 = scalar_lea.sflag [#allocation3], %s326
        %s328 = sand.u32 %s63, 1
        %s329 = smul.addr %s328, 8
        %s330 = scalar_lea.vmem [#allocation2], %s329
        // Predicated region
        $region37: #{tpu_custom_call.1} parent=35 // pred_check
          %p331 = pneg %p76
        $region38: #{tpu_custom_call.1} parent=35 // pred_check_branch
          %333 = sbr.rel (%p331) target = $region40
        $region39: #{tpu_custom_call.1} parent=35 // pred_region
          %334 = dma.done %s327, 128
        $region40: #{tpu_custom_call.1} parent=35 // pred_fallthru
          _
        %s335 = sand.u32 %s32, 1
        %s336 = scalar_lea.sflag [#allocation6], %s335
        %s337 = sand.u32 %s91, 1
        %s338 = smul.addr %s337, 8
        %s339 = scalar_lea.vmem [#allocation5], %s338
        // Predicated region
        $region41: #{tpu_custom_call.1} parent=35 // pred_check
          %p340 = pneg %p104
        $region42: #{tpu_custom_call.1} parent=35 // pred_check_branch
          %342 = sbr.rel (%p340) target = $region44
        $region43: #{tpu_custom_call.1} parent=35 // pred_region
          %343 = dma.done %s336, 128
        $region44: #{tpu_custom_call.1} parent=35 // pred_fallthru
          _
        %s344 = sand.u32 %s32, 1
        %s345 = scalar_lea.sflag [#allocation6], %s344
        %s346 = sand.u32 %s119, 1
        %s347 = smul.addr %s346, 8
        %s348 = scalar_lea.vmem [#allocation7], %s347
        // Predicated region
        $region45: #{tpu_custom_call.1} parent=35 // pred_check
          %p349 = pneg %p132
        $region46: #{tpu_custom_call.1} parent=35 // pred_check_branch
          %351 = sbr.rel (%p349) target = $region48
        $region47: #{tpu_custom_call.1} parent=35 // pred_region
          %352 = dma.done %s345, 128
        $region48: #{tpu_custom_call.1} parent=35 // pred_fallthru
          _
        %s353 = sand.u32 %s147, 1
        %s354 = scalar_lea.sflag [#allocation9], %s353
        %s355 = sand.u32 %s147, 1
        %s356 = smul.addr %s355, 8
        %s357 = scalar_lea.vmem [#allocation8], %s356
        // Predicated region
        $region49: #{tpu_custom_call.1} parent=35 // pred_check
          %p358 = pneg %p160
        $region50: #{tpu_custom_call.1} parent=35 // pred_check_branch
          %360 = sbr.rel (%p358) target = $region52
        $region51: #{tpu_custom_call.1} parent=35 // pred_region
          %361 = dma.done %s354, 128
        $region52: #{tpu_custom_call.1} parent=35 // pred_fallthru
          _
        %s362 = sand.u32 %s63, 1
        %s363 = scalar_lea.sflag [#allocation3], %s362
        %s364 = sand.u32 %s63, 1
        %s365 = smul.addr %s364, 8
        %s366 = scalar_lea.vmem [#allocation2], %s365
        %p367 = pneg %p76
        %p368 = pneg %p73
        %s369 = sand.u32 %s32, 1
        %s370 = scalar_lea.sflag [#allocation6], %s369
        %s371 = sand.u32 %s91, 1
        %s372 = smul.addr %s371, 8
        %s373 = scalar_lea.vmem [#allocation5], %s372
        %p374 = pneg %p104
        %p375 = pneg %p101
        %s376 = sand.u32 %s32, 1
        %s377 = scalar_lea.sflag [#allocation6], %s376
        %s378 = sand.u32 %s119, 1
        %s379 = smul.addr %s378, 8
        %s380 = scalar_lea.vmem [#allocation7], %s379
        %p381 = pneg %p132
        %p382 = pneg %p129
        %s383 = sand.u32 %s147, 1
        %s384 = scalar_lea.sflag [#allocation9], %s383
        %s385 = sand.u32 %s147, 1
        %s386 = smul.addr %s385, 8
        %s387 = scalar_lea.vmem [#allocation8], %s386
        %p388 = pneg %p160
        %p389 = pneg %p157
        %p390 = pneg %p190
        %p391 = pneg %p187
        %s392 = sand.u32 %s177, 1
        %s393 = scalar_lea.sflag [#allocation4], %s392
        %s394 = sand.u32 %s177, 1
        %s395 = smul.addr %s394, 8
        %s396 = scalar_lea.vmem [#allocation10], %s395
        %p397 = pneg %p220
        %p398 = pneg %p217
        %s399 = sand.u32 %s207, 1
        %s400 = scalar_lea.sflag [#allocation12], %s399
        %s401 = sand.u32 %s207, 1
        %s402 = smul.addr %s401, 8
        %s403 = scalar_lea.vmem [#allocation11], %s402
        %v404 = vld [vmem:[%s330] sm:$0xff]
        %v405 = vmul.f32 %v404, 0.17677669
        %v406 = vld [vmem:[%s339] sm:$0xff]
        %v407 = vld [vmem:[%s357] sm:$0xff]
        %vm408 = vcmask 261120
        %v410 = vsel %vm408, %v405, 0
        %v413 = vsel %vm408, %v406, 0
        %415 = vmatprep.subr.mxu0 0.0
        %416 = vmatpush1.xpose.msra.mxu0 0.0
        %417 = vmatprep.subr.mxu0 0.0
        %418 = vmatpush1.xpose.msra.mxu0 0.0
        %419 = vmatprep.subr.mxu0 0.0
        %420 = vmatpush1.xpose.msra.mxu0 0.0
        %421 = vmatprep.subr.mxu0 0.0
        %422 = vmatpush1.xpose.msra.mxu0 0.0
        %423 = vmatprep.subr.mxu0 0.0
        %424 = vmatpush1.xpose.msra.mxu0 0.0
        %425 = vmatprep.subr.mxu0 0.0
        %426 = vmatpush1.xpose.msra.mxu0 0.0
        %427 = vmatprep.subr.mxu0 0.0
        %428 = vmatpush1.xpose.msra.mxu0 0.0
        %429 = vmatprep.subr.mxu0 0.0
        %430 = vmatpush1.xpose.msra.mxu0 0.0
        %431 = vmatprep.subr.mxu0 0.0
        %432 = vmatpush1.xpose.msra.mxu0 0.0
        %433 = vmatprep.subr.mxu0 0.0
        %434 = vmatpush1.xpose.msra.mxu0 0.0
        %435 = vmatprep.subr.mxu0 0.0
        %436 = vmatpush1.xpose.msra.mxu0 0.0
        %437 = vmatprep.subr.mxu0 0.0
        %438 = vmatpush1.xpose.msra.mxu0 0.0
        %439 = vmatprep.subr.mxu0 0.0
        %440 = vmatpush1.xpose.msra.mxu0 0.0
        %441 = vmatprep.subr.mxu0 0.0
        %442 = vmatpush1.xpose.msra.mxu0 0.0
        %443 = vmatprep.subr.mxu0 0.0
        %444 = vmatpush1.xpose.msra.mxu0 0.0
        %445 = vmatprep.subr.mxu0 0.0
        %446 = vmatpush1.xpose.msra.mxu0 %v413
        %447 = vmatprep.subr.mxu0 0.0
        %448 = vmatpush2.xpose.msra.mxu0 0.0
        %449 = vmatprep.subr.mxu0 0.0
        %450 = vmatpush2.xpose.msra.mxu0 0.0
        %451 = vmatprep.subr.mxu0 0.0
        %452 = vmatpush2.xpose.msra.mxu0 0.0
        %453 = vmatprep.subr.mxu0 0.0
        %454 = vmatpush2.xpose.msra.mxu0 0.0
        %455 = vmatprep.subr.mxu0 0.0
        %456 = vmatpush2.xpose.msra.mxu0 0.0
        %457 = vmatprep.subr.mxu0 0.0
        %458 = vmatpush2.xpose.msra.mxu0 0.0
        %459 = vmatprep.subr.mxu0 0.0
        %460 = vmatpush2.xpose.msra.mxu0 0.0
        %461 = vmatprep.subr.mxu0 0.0
        %462 = vmatpush2.xpose.msra.mxu0 0.0
        %463 = vmatprep.subr.mxu0 0.0
        %464 = vmatpush2.xpose.msra.mxu0 0.0
        %465 = vmatprep.subr.mxu0 0.0
        %466 = vmatpush2.xpose.msra.mxu0 0.0
        %467 = vmatprep.subr.mxu0 0.0
        %468 = vmatpush2.xpose.msra.mxu0 0.0
        %469 = vmatprep.subr.mxu0 0.0
        %470 = vmatpush2.xpose.msra.mxu0 0.0
        %471 = vmatprep.subr.mxu0 0.0
        %472 = vmatpush2.xpose.msra.mxu0 0.0
        %473 = vmatprep.subr.mxu0 0.0
        %474 = vmatpush2.xpose.msra.mxu0 0.0
        %475 = vmatprep.subr.mxu0 0.0
        %476 = vmatpush2.xpose.msra.mxu0 0.0
        %477 = vmatprep.subr.mxu0 0.0
        %478 = vmatpush2.xpose.msra.mxu0 0.0
        %479 = vmatprep.mubr.f32.mxu0 0.0
        %480 = vmatmul.mubr.f32.gmra.mxu0 %v410
        %v481 = vpop.f32.mrf.mxu0
        %v482 = vadd.f32 %v407, %v481
        %v483 = vpop.f32.mrf.mxu0
        %484 = vdwg.mxu0
        %vm485 = vcmask 64512
        %v486 = vsel %vm485, %v482, -inf
        %487 = vmax.xlane.f32.xlu0 %v486
        %v488 = vpop.xlane.xlu0 %487
        %v489 = vsub.f32 %v482, %v488
        %v490 = vmul.f32 %v489, 1.442695
        %v491 = vpow.pop %v490
        %v492 = vsel %vm485, %v491, 0.0
        %493 = vadd.xlane.f32.xlu0 %v492
        %v494 = vpop.xlane.xlu0 %493
        %v495 = vrcp.pop %v494
        %v496 = vmul.f32 %v491, %v495
        %497 = vst.msk [vmem:[%s403] sm:$0xff] %vm485, %v496
        %v498 = vld [vmem:[%s348] sm:$0xff]
        %v500 = vsel %vm485, %v496, 0
        %502 = vmatprep.subr.mxu0 0.0
        %503 = vmatpush1.msra.mxu0 0.0
        %504 = vmatprep.subr.mxu0 0.0
        %505 = vmatpush1.msra.mxu0 0.0
        %506 = vmatprep.subr.mxu0 0.0
        %507 = vmatpush1.msra.mxu0 0.0
        %508 = vmatprep.subr.mxu0 0.0
        %509 = vmatpush1.msra.mxu0 0.0
        %510 = vmatprep.subr.mxu0 0.0
        %511 = vmatpush1.msra.mxu0 0.0
        %512 = vmatprep.subr.mxu0 0.0
        %513 = vmatpush1.msra.mxu0 0.0
        %514 = vmatprep.subr.mxu0 0.0
        %515 = vmatpush1.msra.mxu0 0.0
        %516 = vmatprep.subr.mxu0 0.0
        %517 = vmatpush1.msra.mxu0 0.0
        %518 = vmatprep.subr.mxu0 0.0
        %519 = vmatpush1.msra.mxu0 0.0
        %520 = vmatprep.subr.mxu0 0.0
        %521 = vmatpush1.msra.mxu0 0.0
        %522 = vmatprep.subr.mxu0 0.0
        %523 = vmatpush1.msra.mxu0 0.0
        %524 = vmatprep.subr.mxu0 0.0
        %525 = vmatpush1.msra.mxu0 0.0
        %526 = vmatprep.subr.mxu0 0.0
        %527 = vmatpush1.msra.mxu0 0.0
        %528 = vmatprep.subr.mxu0 0.0
        %529 = vmatpush1.msra.mxu0 0.0
        %530 = vmatprep.subr.mxu0 0.0
        %531 = vmatpush1.msra.mxu0 0.0
        %532 = vmatprep.subr.mxu0 0.0
        %533 = vmatpush1.msra.mxu0 %v498
        %534 = vmatprep.subr.mxu0 0.0
        %535 = vmatpush2.msra.mxu0 0.0
        %536 = vmatprep.subr.mxu0 0.0
        %537 = vmatpush2.msra.mxu0 0.0
        %538 = vmatprep.subr.mxu0 0.0
        %539 = vmatpush2.msra.mxu0 0.0
        %540 = vmatprep.subr.mxu0 0.0
        %541 = vmatpush2.msra.mxu0 0.0
        %542 = vmatprep.subr.mxu0 0.0
        %543 = vmatpush2.msra.mxu0 0.0
        %544 = vmatprep.subr.mxu0 0.0
        %545 = vmatpush2.msra.mxu0 0.0
        %546 = vmatprep.subr.mxu0 0.0
        %547 = vmatpush2.msra.mxu0 0.0
        %548 = vmatprep.subr.mxu0 0.0
        %549 = vmatpush2.msra.mxu0 0.0
        %550 = vmatprep.subr.mxu0 0.0
        %551 = vmatpush2.msra.mxu0 0.0
        %552 = vmatprep.subr.mxu0 0.0
        %553 = vmatpush2.msra.mxu0 0.0
        %554 = vmatprep.subr.mxu0 0.0
        %555 = vmatpush2.msra.mxu0 0.0
        %556 = vmatprep.subr.mxu0 0.0
        %557 = vmatpush2.msra.mxu0 0.0
        %558 = vmatprep.subr.mxu0 0.0
        %559 = vmatpush2.msra.mxu0 0.0
        %560 = vmatprep.subr.mxu0 0.0
        %561 = vmatpush2.msra.mxu0 0.0
        %562 = vmatprep.subr.mxu0 0.0
        %563 = vmatpush2.msra.mxu0 0.0
        %564 = vmatprep.subr.mxu0 0.0
        %565 = vmatpush2.msra.mxu0 0.0
        %566 = vmatprep.mubr.f32.mxu0 0.0
        %567 = vmatmul.mubr.f32.gmra.mxu0 %v500
        %v568 = vpop.f32.mrf.mxu0
        %v569 = vadd.f32 0.0, %v568
        %v570 = vpop.f32.mrf.mxu0
        %571 = vdwg.mxu0
        %572 = vst.msk [vmem:[%s396] sm:$0xff] %vm408, %v569
        %s573 = sand.u32 %s177, 1
        %s574 = scalar_lea.sflag [#allocation4], %s573
        %s575 = sand.u32 %s177, 1
        %s576 = smul.addr %s575, 8
        %s577 = scalar_lea.vmem [#allocation10], %s576
        %s578 = sand.u32 %s207, 1
        %s579 = scalar_lea.sflag [#allocation12], %s578
        %s580 = sand.u32 %s207, 1
        %s581 = smul.addr %s580, 8
        %s582 = scalar_lea.vmem [#allocation11], %s581
        // Predicated region
        $region53: #{tpu_custom_call.1} parent=35 // pred_check
          %p583 = pneg %p187
        $region54: #{tpu_custom_call.1} parent=35 // pred_check_branch
          %585 = sbr.rel (%p583) target = $region56
        $region55: #{tpu_custom_call.1} parent=35 // pred_region
          %s587 = ssub.s32 128, 128
          %588 = vsyncadd %s574, %s587
          %s589 = sadd.s32 %s39, %s38
          %s590 = smul.addr %s37, 2
          %s591 = sadd.s32 %s589, %s590
          %s592 = smul.addr %s591, 128
          %s593 = scalar_lea.hbm %s4, %s592
          %s595 = sshll.u32 %s577, 4
          %s596 = int_to_ptr.vmem [resolvable:$true] %s595
          %598 = dma.vmem_to_hbm [thread:$0]  %s596, 128, %s593, %s574
        $region56: #{tpu_custom_call.1} parent=35 // pred_fallthru
          _
        // Predicated region
        $region57: #{tpu_custom_call.1} parent=35 // pred_check
          %p599 = pneg %p217
        $region58: #{tpu_custom_call.1} parent=35 // pred_check_branch
          %601 = sbr.rel (%p599) target = $region60
        $region59: #{tpu_custom_call.1} parent=35 // pred_region
          %s603 = ssub.s32 128, 128
          %604 = vsyncadd %s579, %s603
          %s605 = sadd.s32 %s39, %s38
          %s606 = smul.addr %s37, 2
          %s607 = sadd.s32 %s605, %s606
          %s608 = smul.addr %s607, 128
          %s609 = scalar_lea.hbm %s5, %s608
          %s611 = sshll.u32 %s582, 4
          %s612 = int_to_ptr.vmem [resolvable:$true] %s611
          %614 = dma.vmem_to_hbm [thread:$0]  %s612, 128, %s609, %s579
        $region60: #{tpu_custom_call.1} parent=35 // pred_fallthru
          _
      $region36: #{tpu_custom_call.1} parent=5 // pred_fallthru
        _
      %p615 = scmp.le.s32.totalorder 2, %s27
      // Predicated region
      $region61: #{tpu_custom_call.1} parent=5 // pred_check
        %p616 = pneg %p615
      $region62: #{tpu_custom_call.1} parent=5 // pred_check_branch
        %618 = sbr.rel (%p616) target = $region64
      $region63: #{tpu_custom_call.1} parent=5 // pred_region
        %s619 = ssub.s32 %s27, 2
        // Predicated region
        $region65: #{tpu_custom_call.1} parent=63 // pred_check
          %p620 = pneg %p193
        $region66: #{tpu_custom_call.1} parent=63 // pred_check_branch
          %622 = sbr.rel (%p620) target = $region68
        $region67: #{tpu_custom_call.1} parent=63 // pred_region
          %s623 = sand.u32 %s178, 1
          %s624 = scalar_lea.sflag [#allocation4], %s623
          %s625 = sand.u32 %s178, 1
          %s626 = smul.addr %s625, 8
          %s627 = scalar_lea.vmem [#allocation10], %s626
          %628 = dma.done %s624, 128
        $region68: #{tpu_custom_call.1} parent=63 // pred_fallthru
          _
        // Predicated region
        $region69: #{tpu_custom_call.1} parent=63 // pred_check
          %p629 = pneg %p223
        $region70: #{tpu_custom_call.1} parent=63 // pred_check_branch
          %631 = sbr.rel (%p629) target = $region72
        $region71: #{tpu_custom_call.1} parent=63 // pred_region
          %s632 = sand.u32 %s208, 1
          %s633 = scalar_lea.sflag [#allocation12], %s632
          %s634 = sand.u32 %s208, 1
          %s635 = smul.addr %s634, 8
          %s636 = scalar_lea.vmem [#allocation11], %s635
          %637 = dma.done %s633, 128
        $region72: #{tpu_custom_call.1} parent=63 // pred_fallthru
          _
      $region64: #{tpu_custom_call.1} parent=5 // pred_fallthru
        _
    $region6: #{tpu_custom_call.1} parent=1 // loop_footer
      %s31 = sadd.s32 1, %s27
    $region7: #{tpu_custom_call.1} parent=1 // loop_footer_branch
      %26 = sbr.rel target = $region3
    $region8: #{tpu_custom_call.1} parent=1 // loop_exit
      _
    %638 = vsyncpa [#allocation3], 1
    %s639 = scalar_lea.sflag [#allocation3], 1
    %640 = vsyncpa %s639, 1
    %641 = vsyncpa [#allocation6], 1
    %s642 = scalar_lea.sflag [#allocation6], 1
    %643 = vsyncpa %s642, 1
    %644 = vsyncpa [#allocation9], 1
    %s645 = scalar_lea.sflag [#allocation9], 1
    %646 = vsyncpa %s645, 1
    %647 = vsyncpa [#allocation4], 1
    %s648 = scalar_lea.sflag [#allocation4], 1
    %649 = vsyncpa %s648, 1
    %650 = vsyncpa [#allocation12], 1
    %s651 = scalar_lea.sflag [#allocation12], 1
    %652 = vsyncpa %s651, 1

</llo_original>
